<compile_context>
chip_gen: v5e
topology: v5e:2x2
jax: 0.10.0
libtpu: 0.0.40
codegen_flags: <defaults>
</compile_context>

<pallas_src>
import functools

import jax
import jax.numpy as jnp
from jax.experimental import pallas as pl
from jax.experimental.pallas import tpu as pltpu

_NEG_SLOPE = 0.01
_LANES = 128
_MIN_KERNEL_ROWS = 512       # below this a kernel launch isn't worth it -> plain XLA


def _leaky(y):
    return jnp.where(y >= 0, y, _NEG_SLOPE * y)


def _round_up(n, m):
    return ((n + m - 1) // m) * m


def _dtr_kernel(dims, x1_ref, x2_ref, x3_ref,
                w1_ref, w2_ref, w3_ref,
                b1_ref, b2_ref, b3_ref,
                o1_ref, o2_ref, o3_ref):
    """One fused grid step: three leaky_relu(x @ w^T + b) heads on packed blocks."""

    def head(x_ref, w_ref, b_ref, o_ref, feat):
        groups = _LANES // feat            # original rows packed per 128-lane row
        tp = x_ref.shape[0]                # packed rows in this block
        # (tp,128) * (1,128): products at full lane utilization (VPU).
        prod = x_ref[...] * w_ref[...]
        # Move features from lanes to sublanes (one relayout), then the per-row
        # reduction is a cheap cross-vreg / sublane sum, and the result is already
        # lane-dense along the packed-row axis (no skinny MXU matmul, no column
        # outputs / masked stores).
        pt = prod.T                                            # (128, tp)
        g = jnp.sum(pt.reshape(groups, feat, tp), axis=1)      # (groups, tp)
        y = g + b_ref[0, 0]                                    # scalar bias (SMEM)
        o_ref[...] = _leaky(y).astype(o_ref.dtype)

    head(x1_ref, w1_ref, b1_ref, o1_ref, dims[0])
    head(x2_ref, w2_ref, b2_ref, o2_ref, dims[1])
    head(x3_ref, w3_ref, b3_ref, o3_ref, dims[2])


def _head_xla(x, w, b):
    """Plain-XLA head (fallback / remainder rows): leaky_relu(x @ w^T + b)."""
    y = x @ w[0] + b[0, 0]
    return _leaky(y).astype(x.dtype)


def _pick_tile(n_main, tile_rows):
    """Row tile: multiple of 512 (keeps packed blocks (8,128)-aligned) and small
    enough that large inputs still give >= 2 grid steps for megacore sharding."""
    tile_rows = max(512, (tile_rows // 512) * 512)
    return max(512, min(tile_rows, _round_up(n_main // 2, 512)))


def dtr_forward(h_lrn_cpt, h_scn_cpt, h_scn, params, *, tile_rows=8192):
    """Fused DTR forward: three leaky_relu(Linear(., 1)) heads in one pallas_call."""
    lead = h_lrn_cpt.shape[:-1]
    assert h_scn_cpt.shape[:-1] == lead and h_scn.shape[:-1] == lead, (
        "fused DTR kernel assumes the three inputs share leading dims")

    xs = [a.reshape(-1, a.shape[-1]) for a in (h_lrn_cpt, h_scn_cpt, h_scn)]
    ds = [x.shape[-1] for x in xs]
    n = xs[0].shape[0]

    ws = [params["w_p_lrn"], params["w_d_scn"], params["w_b_scn"]]   # (1, D_i)
    bs = [params["b_p_lrn"], params["b_d_scn"], params["b_b_scn"]]   # (1, 1)

    packable = all(_LANES % d == 0 for d in ds)
    if packable:
        groups = [_LANES // d for d in ds]
        gmax = max(groups)
        n_main = (n // gmax) * gmax
    else:
        n_main = 0

    if (not packable) or n_main < _MIN_KERNEL_ROWS:
        # TODO(synk): feature dims that don't divide 128 (or tiny N) use plain XLA.
        return tuple(_head_xla(x, w, b).reshape(lead)
                     for x, w, b in zip(xs, ws, bs))

    tile = _pick_tile(n_main, tile_rows)
    grid = (pl.cdiv(n_main, tile),)

    # Lane-dense packed views: (n_main, D) -> (n_main*D/128, 128).  Metadata-only
    # reshape for contiguous row-major inputs (no HBM copy).
    xs_main = xs if n_main == n else [x[:n_main] for x in xs]
    xps = [x.reshape(n_main * d // _LANES, _LANES) for x, d in zip(xs_main, ds)]
    # Lane-tiled weights: (1, D) -> (1, 128), loaded once (grid-invariant blocks).
    wts = [jnp.tile(w, (1, _LANES // d)) for w, d in zip(ws, ds)]

    tps = [tile * d // _LANES for d in ds]          # packed rows per block, per head

    x_specs = [pl.BlockSpec((tp, _LANES), lambda i: (i, 0)) for tp in tps]
    w_specs = [pl.BlockSpec((1, _LANES), lambda i: (0, 0))] * 3
    b_specs = [pl.BlockSpec(memory_space=pltpu.MemorySpace.SMEM)] * 3
    o_specs = [pl.BlockSpec((g, tp), lambda i: (0, i)) for g, tp in zip(groups, tps)]
    o_shapes = [jax.ShapeDtypeStruct((g, n_main // g), x.dtype)
                for g, x in zip(groups, xs)]

    kernel = functools.partial(_dtr_kernel, tuple(ds))
    outs = pl.pallas_call(
        kernel,
        grid=grid,
        in_specs=x_specs + w_specs + b_specs,
        out_specs=o_specs,
        out_shape=o_shapes,
        compiler_params=pltpu.CompilerParams(
            dimension_semantics=("parallel",),
            vmem_limit_bytes=48 * 1024 * 1024),
    )(*xps, *wts, *bs)

    # Kernel output is (groups, n_main/groups) with original row r at [r % g, r // g];
    # de-interleave on the tiny output in the wrapper (layout plumbing, ~N floats).
    flats = [o.T.reshape(-1) for o in outs]
    if n_main != n:
        tails = [_head_xla(x[n_main:], w, b) for x, w, b in zip(xs, ws, bs)]
        flats = [jnp.concatenate([f, t], axis=0) for f, t in zip(flats, tails)]
    return tuple(f.reshape(lead) for f in flats)


class DTRPallas:
    """JAX/Pallas reimplementation of the PyTorch DTR module."""

    def __init__(self, embedding_dim, key):
        self.embedding_dim = embedding_dim
        E = embedding_dim
        ks = jax.random.split(key, 6)

        # nn.Linear(in_features, 1) init; weight stored as a (1, in) row vector.
        def init_w(k, fan_in):
            bound = 1.0 / (fan_in ** 0.5)
            return jax.random.uniform(k, (1, fan_in), jnp.float32, -bound, bound)

        def init_b(k, fan_in):
            bound = 1.0 / (fan_in ** 0.5)
            return jax.random.uniform(k, (1, 1), jnp.float32, -bound, bound)

        self.params = {
            "w_p_lrn": init_w(ks[0], 2 * E), "b_p_lrn": init_b(ks[1], 2 * E),
            "w_d_scn": init_w(ks[2], 2 * E), "b_d_scn": init_b(ks[3], 2 * E),
            "w_b_scn": init_w(ks[4], E),     "b_b_scn": init_b(ks[5], E),
        }

    def __call__(self, h_lrn_cpt, h_scn_cpt, h_scn):
        return dtr_forward(h_lrn_cpt, h_scn_cpt, h_scn, self.params)


if __name__ == "__main__":
    key = jax.random.PRNGKey(0)
    k_params, k1, k2, k3 = jax.random.split(key, 4)

    embedding_dim = 32
    batch, seq = 2, 256          # N = 512 rows -> exercises the packed kernel path

    model = DTRPallas(embedding_dim, k_params)

    h_lrn_cpt = jax.random.normal(k1, (batch, seq, 2 * embedding_dim), jnp.float32)
    h_scn_cpt = jax.random.normal(k2, (batch, seq, 2 * embedding_dim), jnp.float32)
    h_scn = jax.random.normal(k3, (batch, seq, embedding_dim), jnp.float32)

    p_lrn, d_scn, beta_scn = model(h_lrn_cpt, h_scn_cpt, h_scn)
    jax.block_until_ready((p_lrn, d_scn, beta_scn))

    # Plain-JAX reference.  Kernel math is all-f32 on the VPU, so tolerance is tight.
    def ref(h, w, b):
        y = jnp.einsum("nd,d->n", h.reshape(-1, h.shape[-1]), w[0]) + b[0, 0]
        return jnp.where(y >= 0, y, _NEG_SLOPE * y).reshape(h.shape[:-1])

    p = model.params
    ref_p = ref(h_lrn_cpt, p["w_p_lrn"], p["b_p_lrn"])
    ref_d = ref(h_scn_cpt, p["w_d_scn"], p["b_d_scn"])
    ref_b = ref(h_scn, p["w_b_scn"], p["b_b_scn"])

    assert p_lrn.shape == (batch, seq)
    assert d_scn.shape == (batch, seq)
    assert beta_scn.shape == (batch, seq)
    assert jnp.allclose(p_lrn, ref_p, atol=1e-3, rtol=1e-3)
    assert jnp.allclose(d_scn, ref_d, atol=1e-3, rtol=1e-3)
    assert jnp.allclose(beta_scn, ref_b, atol=1e-3, rtol=1e-3)

    print("KERNEL_OK")
</pallas_src>

<mosaic_0001>
module attributes {stable_mosaic.version = 11 : i64} {
  func.func @_dtr_kernel(%arg0: i32, %arg1: memref<256x128xf32, #tpu.memory_space<vmem>>, %arg2: memref<256x128xf32, #tpu.memory_space<vmem>>, %arg3: memref<128x128xf32, #tpu.memory_space<vmem>>, %arg4: memref<1x128xf32, #tpu.memory_space<vmem>>, %arg5: memref<1x128xf32, #tpu.memory_space<vmem>>, %arg6: memref<1x128xf32, #tpu.memory_space<vmem>>, %arg7: memref<1x1xf32, #tpu.memory_space<smem>>, %arg8: memref<1x1xf32, #tpu.memory_space<smem>>, %arg9: memref<1x1xf32, #tpu.memory_space<smem>>, %arg10: memref<2x256xf32, #tpu.memory_space<vmem>>, %arg11: memref<2x256xf32, #tpu.memory_space<vmem>>, %arg12: memref<4x128xf32, #tpu.memory_space<vmem>>) attributes {dimension_semantics = [#tpu.dimension_semantics<parallel>], iteration_bounds = array<i64: 1>, scalar_prefetch = 0 : i64, scratch_operands = 0 : i64, tpu.core_type = #tpu.core_type<tc>, window_params = [{transform_indices = @transform_0, window_bounds = array<i64: 256, 128>}, {transform_indices = @transform_1, window_bounds = array<i64: 256, 128>}, {transform_indices = @transform_2, window_bounds = array<i64: 128, 128>}, {pipeline_mode = #tpu.pipeline_mode<synchronous>, transform_indices = @transform_3, window_bounds = array<i64: 1, 128>}, {pipeline_mode = #tpu.pipeline_mode<synchronous>, transform_indices = @transform_4, window_bounds = array<i64: 1, 128>}, {pipeline_mode = #tpu.pipeline_mode<synchronous>, transform_indices = @transform_5, window_bounds = array<i64: 1, 128>}, {transform_indices = @transform_6, window_bounds = array<i64: 1, 1>}, {transform_indices = @transform_7, window_bounds = array<i64: 1, 1>}, {transform_indices = @transform_8, window_bounds = array<i64: 1, 1>}, {transform_indices = @transform_9, window_bounds = array<i64: 2, 256>}, {transform_indices = @transform_10, window_bounds = array<i64: 2, 256>}, {transform_indices = @transform_11, window_bounds = array<i64: 4, 128>}]} {
    %c0 = arith.constant 0 : index
    %c0_0 = arith.constant 0 : index
    %0 = vector.load %arg1[%c0, %c0_0] : memref<256x128xf32, #tpu.memory_space<vmem>>, vector<256x128xf32>
    %c0_1 = arith.constant 0 : index
    %c0_2 = arith.constant 0 : index
    %1 = vector.load %arg4[%c0_1, %c0_2] : memref<1x128xf32, #tpu.memory_space<vmem>>, vector<1x128xf32>
    %2 = vector.broadcast %1 : vector<1x128xf32> to vector<256x128xf32>
    %3 = arith.mulf %0, %2 : vector<256x128xf32>
    %4 = tpu.transpose %3, [1, 0] : vector<256x128xf32> -> vector<128x256xf32>
    %5 = vector.shape_cast %4 : vector<128x256xf32> to vector<2x64x256xf32>
    %cst = arith.constant dense<0.000000e+00> : vector<2x256xf32>
    %6 = vector.multi_reduction <add>, %5, %cst [1] : vector<2x64x256xf32> to vector<2x256xf32>
    %c0_3 = arith.constant 0 : index
    %c0_4 = arith.constant 0 : index
    %7 = memref.load %arg7[%c0_3, %c0_4] : memref<1x1xf32, #tpu.memory_space<smem>>
    %8 = vector.broadcast %7 : f32 to vector<2x256xf32>
    %9 = arith.addf %6, %8 : vector<2x256xf32>
    %cst_5 = arith.constant 0.000000e+00 : f32
    %10 = vector.broadcast %cst_5 : f32 to vector<2x256xf32>
    %11 = arith.cmpf oge, %9, %10 : vector<2x256xf32>
    %cst_6 = arith.constant 0.00999999977 : f32
    %12 = vector.broadcast %cst_6 : f32 to vector<2x256xf32>
    %13 = arith.mulf %12, %9 : vector<2x256xf32>
    %14 = arith.select %11, %9, %13 : vector<2x256xi1>, vector<2x256xf32>
    %c0_7 = arith.constant 0 : index
    %c0_8 = arith.constant 0 : index
    %15 = vector.load %arg10[%c0_7, %c0_8] : memref<2x256xf32, #tpu.memory_space<vmem>>, vector<2x256xf32>
    tpu.vector_store %arg10[%c0_7, %c0_8], %14 {strides = array<i32>} : memref<2x256xf32, #tpu.memory_space<vmem>>, vector<2x256xf32>,
    %c0_9 = arith.constant 0 : index
    %c0_10 = arith.constant 0 : index
    %16 = vector.load %arg2[%c0_9, %c0_10] : memref<256x128xf32, #tpu.memory_space<vmem>>, vector<256x128xf32>
    %c0_11 = arith.constant 0 : index
    %c0_12 = arith.constant 0 : index
    %17 = vector.load %arg5[%c0_11, %c0_12] : memref<1x128xf32, #tpu.memory_space<vmem>>, vector<1x128xf32>
    %18 = vector.broadcast %17 : vector<1x128xf32> to vector<256x128xf32>
    %19 = arith.mulf %16, %18 : vector<256x128xf32>
    %20 = tpu.transpose %19, [1, 0] : vector<256x128xf32> -> vector<128x256xf32>
    %21 = vector.shape_cast %20 : vector<128x256xf32> to vector<2x64x256xf32>
    %cst_13 = arith.constant dense<0.000000e+00> : vector<2x256xf32>
    %22 = vector.multi_reduction <add>, %21, %cst_13 [1] : vector<2x64x256xf32> to vector<2x256xf32>
    %c0_14 = arith.constant 0 : index
    %c0_15 = arith.constant 0 : index
    %23 = memref.load %arg8[%c0_14, %c0_15] : memref<1x1xf32, #tpu.memory_space<smem>>
    %24 = vector.broadcast %23 : f32 to vector<2x256xf32>
    %25 = arith.addf %22, %24 : vector<2x256xf32>
    %cst_16 = arith.constant 0.000000e+00 : f32
    %26 = vector.broadcast %cst_16 : f32 to vector<2x256xf32>
    %27 = arith.cmpf oge, %25, %26 : vector<2x256xf32>
    %cst_17 = arith.constant 0.00999999977 : f32
    %28 = vector.broadcast %cst_17 : f32 to vector<2x256xf32>
    %29 = arith.mulf %28, %25 : vector<2x256xf32>
    %30 = arith.select %27, %25, %29 : vector<2x256xi1>, vector<2x256xf32>
    %c0_18 = arith.constant 0 : index
    %c0_19 = arith.constant 0 : index
    %31 = vector.load %arg11[%c0_18, %c0_19] : memref<2x256xf32, #tpu.memory_space<vmem>>, vector<2x256xf32>
    tpu.vector_store %arg11[%c0_18, %c0_19], %30 {strides = array<i32>} : memref<2x256xf32, #tpu.memory_space<vmem>>, vector<2x256xf32>,
    %c0_20 = arith.constant 0 : index
    %c0_21 = arith.constant 0 : index
    %32 = vector.load %arg3[%c0_20, %c0_21] : memref<128x128xf32, #tpu.memory_space<vmem>>, vector<128x128xf32>
    %c0_22 = arith.constant 0 : index
    %c0_23 = arith.constant 0 : index
    %33 = vector.load %arg6[%c0_22, %c0_23] : memref<1x128xf32, #tpu.memory_space<vmem>>, vector<1x128xf32>
    %34 = vector.broadcast %33 : vector<1x128xf32> to vector<128x128xf32>
    %35 = arith.mulf %32, %34 : vector<128x128xf32>
    %36 = tpu.transpose %35, [1, 0] : vector<128x128xf32> -> vector<128x128xf32>
    %37 = vector.shape_cast %36 : vector<128x128xf32> to vector<4x32x128xf32>
    %cst_24 = arith.constant dense<0.000000e+00> : vector<4x128xf32>
    %38 = vector.multi_reduction <add>, %37, %cst_24 [1] : vector<4x32x128xf32> to vector<4x128xf32>
    %c0_25 = arith.constant 0 : index
    %c0_26 = arith.constant 0 : index
    %39 = memref.load %arg9[%c0_25, %c0_26] : memref<1x1xf32, #tpu.memory_space<smem>>
    %40 = vector.broadcast %39 : f32 to vector<4x128xf32>
    %41 = arith.addf %38, %40 : vector<4x128xf32>
    %cst_27 = arith.constant 0.000000e+00 : f32
    %42 = vector.broadcast %cst_27 : f32 to vector<4x128xf32>
    %43 = arith.cmpf oge, %41, %42 : vector<4x128xf32>
    %cst_28 = arith.constant 0.00999999977 : f32
    %44 = vector.broadcast %cst_28 : f32 to vector<4x128xf32>
    %45 = arith.mulf %44, %41 : vector<4x128xf32>
    %46 = arith.select %43, %41, %45 : vector<4x128xi1>, vector<4x128xf32>
    %c0_29 = arith.constant 0 : index
    %c0_30 = arith.constant 0 : index
    %47 = vector.load %arg12[%c0_29, %c0_30] : memref<4x128xf32, #tpu.memory_space<vmem>>, vector<4x128xf32>
    tpu.vector_store %arg12[%c0_29, %c0_30], %46 {strides = array<i32>} : memref<4x128xf32, #tpu.memory_space<vmem>>, vector<4x128xf32>,
    return
  }
  func.func @transform_0(%arg0: i32) -> (i32, i32) {
    %c0_i32 = arith.constant 0 : i32
    %c0_i32_0 = arith.constant 0 : i32
    return %arg0, %c0_i32 : i32, i32
  }
  func.func @transform_1(%arg0: i32) -> (i32, i32) {
    %c0_i32 = arith.constant 0 : i32
    %c0_i32_0 = arith.constant 0 : i32
    return %arg0, %c0_i32 : i32, i32
  }
  func.func @transform_2(%arg0: i32) -> (i32, i32) {
    %c0_i32 = arith.constant 0 : i32
    %c0_i32_0 = arith.constant 0 : i32
    return %arg0, %c0_i32 : i32, i32
  }
  func.func @transform_3(%arg0: i32) -> (i32, i32) {
    %c0_i32 = arith.constant 0 : i32
    %c0_i32_0 = arith.constant 0 : i32
    %c0_i32_1 = arith.constant 0 : i32
    return %c0_i32, %c0_i32_0 : i32, i32
  }
  func.func @transform_4(%arg0: i32) -> (i32, i32) {
    %c0_i32 = arith.constant 0 : i32
    %c0_i32_0 = arith.constant 0 : i32
    %c0_i32_1 = arith.constant 0 : i32
    return %c0_i32, %c0_i32_0 : i32, i32
  }
  func.func @transform_5(%arg0: i32) -> (i32, i32) {
    %c0_i32 = arith.constant 0 : i32
    %c0_i32_0 = arith.constant 0 : i32
    %c0_i32_1 = arith.constant 0 : i32
    return %c0_i32, %c0_i32_0 : i32, i32
  }
  func.func @transform_6(%arg0: i32) -> (i32, i32) {
    %c0_i32 = arith.constant 0 : i32
    %c0_i32_0 = arith.constant 0 : i32
    %c0_i32_1 = arith.constant 0 : i32
    return %c0_i32, %c0_i32_0 : i32, i32
  }
  func.func @transform_7(%arg0: i32) -> (i32, i32) {
    %c0_i32 = arith.constant 0 : i32
    %c0_i32_0 = arith.constant 0 : i32
    %c0_i32_1 = arith.constant 0 : i32
    return %c0_i32, %c0_i32_0 : i32, i32
  }
  func.func @transform_8(%arg0: i32) -> (i32, i32) {
    %c0_i32 = arith.constant 0 : i32
    %c0_i32_0 = arith.constant 0 : i32
    %c0_i32_1 = arith.constant 0 : i32
    return %c0_i32, %c0_i32_0 : i32, i32
  }
  func.func @transform_9(%arg0: i32) -> (i32, i32) {
    %c0_i32 = arith.constant 0 : i32
    %c0_i32_0 = arith.constant 0 : i32
    return %c0_i32, %arg0 : i32, i32
  }
  func.func @transform_10(%arg0: i32) -> (i32, i32) {
    %c0_i32 = arith.constant 0 : i32
    %c0_i32_0 = arith.constant 0 : i32
    return %c0_i32, %arg0 : i32, i32
  }
  func.func @transform_11(%arg0: i32) -> (i32, i32) {
    %c0_i32 = arith.constant 0 : i32
    %c0_i32_0 = arith.constant 0 : i32
    return %c0_i32, %arg0 : i32, i32
  }
}

</mosaic_0001>

<llo_original>
// kernel: tpu_custom_call.1
$region0: #{tpu_custom_call.1}
  #allocation0 [shape = 'u32[]', space=smem, size = 0x4, offset = 0x4, fixed_abs, tag = 'smem constant byte address 0x4 - core index']
  #allocation1 [shape = 'u32[72,128]{1,0:T(1,128)}', space=vmem, size = 0x9000, scoped, tag = 'internal scratch']
  #allocation2 [shape = 'f32[1,1]{1,0:T(1,128)S(6)}', space=smem, size = 0x200, scoped, tag = 'scoped memory for tpu_custom_call.1']
  #allocation3 [shape = 'f32[1,1]{1,0:T(1,128)S(6)}', space=smem, size = 0x200, scoped, tag = 'scoped memory for tpu_custom_call.1']
  #allocation4 [shape = 'f32[1,1]{1,0:T(1,128)S(6)}', space=smem, size = 0x200, scoped, tag = 'scoped memory for tpu_custom_call.1']
  %s0 = inlined_call_operand.hbm [shape: f32[256,128], index: 0, kind: input, shape index: {}]
  %s1 = inlined_call_operand.hbm [shape: f32[256,128], index: 1, kind: input, shape index: {}]
  %s2 = inlined_call_operand.hbm [shape: f32[128,128], index: 2, kind: input, shape index: {}]
  %s3 = inlined_call_operand.vmem [shape: f32[1,128], index: 3, kind: input, shape index: {}]
  %s4 = inlined_call_operand.vmem [shape: f32[1,128], index: 4, kind: input, shape index: {}]
  %s5 = inlined_call_operand.vmem [shape: f32[1,128], index: 5, kind: input, shape index: {}]
  %s6 = inlined_call_operand.<no memory space> [shape: f32[1,1], index: 6, kind: input, shape index: {}]
  %s7 = inlined_call_operand.<no memory space> [shape: f32[1,1], index: 7, kind: input, shape index: {}]
  %s8 = inlined_call_operand.<no memory space> [shape: f32[1,1], index: 8, kind: input, shape index: {}]
  %s9 = inlined_call_operand.hbm [shape: f32[2,256], index: 9, kind: output, shape index: {0}]
  %s10 = inlined_call_operand.hbm [shape: f32[2,256], index: 10, kind: output, shape index: {1}]
  %s11 = inlined_call_operand.hbm [shape: f32[4,128], index: 11, kind: output, shape index: {2}]
  %12 = xla_tuple %s9, %s10, %s11
  %s13 = sld [smem:[#allocation0]]
  $region74: #{tpu_custom_call.1} parent=0
    _
  %s15 = ssub.s32 1, %s13
  %s16 = scalar_select 0, %s15, %s13
  %17 = sst [smem:[#allocation2]] %s6
  %18 = sst [smem:[#allocation3]] %s7
  %19 = sst [smem:[#allocation4]] %s8
  $region1: #{tpu_custom_call.1} parent=0
    #allocation5 [shape = 'u8[131072]{0}', space=vmem, size = 0x20000, scoped, tag = 'input window, operand 0, single buffered']
    #allocation6 [shape = 's32[1]{0}', space=sflag, size = 0x4, scoped, tag = 'scoped memory for tpu_custom_call.1']
    #allocation7 [shape = 's32[1]{0}', space=sflag, size = 0x4, scoped, tag = 'scoped memory for tpu_custom_call.1']
    #allocation8 [shape = 'u8[131072]{0}', space=vmem, size = 0x20000, scoped, tag = 'input window, operand 1, single buffered']
    #allocation9 [shape = 's32[1]{0}', space=sflag, size = 0x4, scoped, tag = 'scoped memory for tpu_custom_call.1']
    #allocation10 [shape = 'u8[65536]{0}', space=vmem, size = 0x10000, scoped, tag = 'input window, operand 2, single buffered']
    #allocation11 [shape = 'u8[2048]{0}', space=vmem, size = 0x800, scoped, tag = 'output window, operand 0, single buffered']
    #allocation12 [shape = 'u8[2048]{0}', space=vmem, size = 0x800, scoped, tag = 'output window, operand 1, single buffered']
    #allocation13 [shape = 's32[1]{0}', space=sflag, size = 0x4, scoped, tag = 'scoped memory for tpu_custom_call.1']
    #allocation14 [shape = 'u8[2048]{0}', space=vmem, size = 0x800, scoped, tag = 'output window, operand 2, single buffered']
    %20 = vsyncpa [#allocation6], 0
    %21 = vsyncpa [#allocation9], 0
    %22 = vsyncpa [#allocation7], 0
    %23 = vsyncpa [#allocation13], 0
    // Predicated region
    $region2: #{tpu_custom_call.1} parent=1 // pred_check
      _
    $region3: #{tpu_custom_call.1} parent=1 // pred_check_branch
      %25 = sbr.rel (0) target = $region5
    $region4: #{tpu_custom_call.1} parent=1 // pred_region
      %27 = vsyncadd [#allocation6], 0
      %s28 = sshll.u32 %s0, 4
      %s29 = int_to_ptr.hbm [resolvable:$true] %s28
      %s30 = sshll.u32 [#allocation5], 4
      %s31 = int_to_ptr.vmem [resolvable:$true] %s30
      %36 = dma.hbm_to_vmem [thread:$0]  %s29, 4096, %s31, [#allocation6], 128, 128, 8
    $region5: #{tpu_custom_call.1} parent=1 // pred_fallthru
      _
    // Predicated region
    $region6: #{tpu_custom_call.1} parent=1 // pred_check
      _
    $region7: #{tpu_custom_call.1} parent=1 // pred_check_branch
      %38 = sbr.rel (0) target = $region9
    $region8: #{tpu_custom_call.1} parent=1 // pred_region
      %40 = vsyncadd [#allocation9], 0
      %s41 = sshll.u32 %s1, 4
      %s42 = int_to_ptr.hbm [resolvable:$true] %s41
      %s43 = sshll.u32 [#allocation8], 4
      %s44 = int_to_ptr.vmem [resolvable:$true] %s43
      %49 = dma.hbm_to_vmem [thread:$0]  %s42, 4096, %s44, [#allocation9], 128, 128, 8
    $region9: #{tpu_custom_call.1} parent=1 // pred_fallthru
      _
    // Predicated region
    $region10: #{tpu_custom_call.1} parent=1 // pred_check
      _
    $region11: #{tpu_custom_call.1} parent=1 // pred_check_branch
      %51 = sbr.rel (0) target = $region13
    $region12: #{tpu_custom_call.1} parent=1 // pred_region
      %53 = vsyncadd [#allocation9], 0
      %s54 = sshll.u32 %s2, 4
      %s55 = int_to_ptr.hbm [resolvable:$true] %s54
      %s56 = sshll.u32 [#allocation10], 4
      %s57 = int_to_ptr.vmem [resolvable:$true] %s56
      %62 = dma.hbm_to_vmem [thread:$0]  %s55, 2048, %s57, [#allocation9], 128, 128, 8
    $region13: #{tpu_custom_call.1} parent=1 // pred_fallthru
      _
    // Predicated region
    $region14: #{tpu_custom_call.1} parent=1 // pred_check
      _
    $region15: #{tpu_custom_call.1} parent=1 // pred_check_branch
      %64 = sbr.rel (0) target = $region17
    $region16: #{tpu_custom_call.1} parent=1 // pred_region
      _
    $region17: #{tpu_custom_call.1} parent=1 // pred_fallthru
      _
    // Predicated region
    $region18: #{tpu_custom_call.1} parent=1 // pred_check
      _
    $region19: #{tpu_custom_call.1} parent=1 // pred_check_branch
      %66 = sbr.rel (0) target = $region21
    $region20: #{tpu_custom_call.1} parent=1 // pred_region
      _
    $region21: #{tpu_custom_call.1} parent=1 // pred_fallthru
      _
    // Predicated region
    $region22: #{tpu_custom_call.1} parent=1 // pred_check
      _
    $region23: #{tpu_custom_call.1} parent=1 // pred_check_branch
      %68 = sbr.rel (0) target = $region25
    $region24: #{tpu_custom_call.1} parent=1 // pred_region
      _
    $region25: #{tpu_custom_call.1} parent=1 // pred_fallthru
      _
    // Predicated region
    $region26: #{tpu_custom_call.1} parent=1 // pred_check
      _
    $region27: #{tpu_custom_call.1} parent=1 // pred_check_branch
      %70 = sbr.rel (0) target = $region29
    $region28: #{tpu_custom_call.1} parent=1 // pred_region
      _
    $region29: #{tpu_custom_call.1} parent=1 // pred_fallthru
      _
    // Predicated region
    $region30: #{tpu_custom_call.1} parent=1 // pred_check
      _
    $region31: #{tpu_custom_call.1} parent=1 // pred_check_branch
      %72 = sbr.rel (0) target = $region33
    $region32: #{tpu_custom_call.1} parent=1 // pred_region
      _
    $region33: #{tpu_custom_call.1} parent=1 // pred_fallthru
      _
    // Predicated region
    $region34: #{tpu_custom_call.1} parent=1 // pred_check
      _
    $region35: #{tpu_custom_call.1} parent=1 // pred_check_branch
      %74 = sbr.rel (0) target = $region37
    $region36: #{tpu_custom_call.1} parent=1 // pred_region
      _
    $region37: #{tpu_custom_call.1} parent=1 // pred_fallthru
      _
    // Predicated region
    $region38: #{tpu_custom_call.1} parent=1 // pred_check
      _
    $region39: #{tpu_custom_call.1} parent=1 // pred_check_branch
      %76 = sbr.rel (0) target = $region41
    $region40: #{tpu_custom_call.1} parent=1 // pred_region
      %78 = dma.done [#allocation6], 4096
    $region41: #{tpu_custom_call.1} parent=1 // pred_fallthru
      _
    // Predicated region
    $region42: #{tpu_custom_call.1} parent=1 // pred_check
      _
    $region43: #{tpu_custom_call.1} parent=1 // pred_check_branch
      %80 = sbr.rel (0) target = $region45
    $region44: #{tpu_custom_call.1} parent=1 // pred_region
      %82 = dma.done [#allocation9], 4096
    $region45: #{tpu_custom_call.1} parent=1 // pred_fallthru
      _
    // Predicated region
    $region46: #{tpu_custom_call.1} parent=1 // pred_check
      _
    $region47: #{tpu_custom_call.1} parent=1 // pred_check_branch
      %84 = sbr.rel (0) target = $region49
    $region48: #{tpu_custom_call.1} parent=1 // pred_region
      %86 = dma.done [#allocation9], 2048
    $region49: #{tpu_custom_call.1} parent=1 // pred_fallthru
      _
    %v87 = vld [vmem:[#allocation5] sm:$0xff]
    %v88 = vld [vmem:[#allocation5 + $0x8] sm:$0xff]
    %v89 = vld [vmem:[#allocation5 + $0x10] sm:$0xff]
    %v90 = vld [vmem:[#allocation5 + $0x18] sm:$0xff]
    %v91 = vld [vmem:[#allocation5 + $0x20] sm:$0xff]
    %v92 = vld [vmem:[#allocation5 + $0x28] sm:$0xff]
    %v93 = vld [vmem:[#allocation5 + $0x30] sm:$0xff]
    %v94 = vld [vmem:[#allocation5 + $0x38] sm:$0xff]
    %v95 = vld [vmem:[#allocation5 + $0x40] sm:$0xff]
    %v96 = vld [vmem:[#allocation5 + $0x48] sm:$0xff]
    %v97 = vld [vmem:[#allocation5 + $0x50] sm:$0xff]
    %v98 = vld [vmem:[#allocation5 + $0x58] sm:$0xff]
    %v99 = vld [vmem:[#allocation5 + $0x60] sm:$0xff]
    %v100 = vld [vmem:[#allocation5 + $0x68] sm:$0xff]
    %v101 = vld [vmem:[#allocation5 + $0x70] sm:$0xff]
    %v102 = vld [vmem:[#allocation5 + $0x78] sm:$0xff]
    %v103 = vld [vmem:[#allocation5 + $0x80] sm:$0xff]
    %v104 = vld [vmem:[#allocation5 + $0x88] sm:$0xff]
    %v105 = vld [vmem:[#allocation5 + $0x90] sm:$0xff]
    %v106 = vld [vmem:[#allocation5 + $0x98] sm:$0xff]
    %v107 = vld [vmem:[#allocation5 + $0xa0] sm:$0xff]
    %v108 = vld [vmem:[#allocation5 + $0xa8] sm:$0xff]
    %v109 = vld [vmem:[#allocation5 + $0xb0] sm:$0xff]
    %v110 = vld [vmem:[#allocation5 + $0xb8] sm:$0xff]
    %v111 = vld [vmem:[#allocation5 + $0xc0] sm:$0xff]
    %v112 = vld [vmem:[#allocation5 + $0xc8] sm:$0xff]
    %v113 = vld [vmem:[#allocation5 + $0xd0] sm:$0xff]
    %v114 = vld [vmem:[#allocation5 + $0xd8] sm:$0xff]
    %v115 = vld [vmem:[#allocation5 + $0xe0] sm:$0xff]
    %v116 = vld [vmem:[#allocation5 + $0xe8] sm:$0xff]
    %v117 = vld [vmem:[#allocation5 + $0xf0] sm:$0xff]
    %v118 = vld [vmem:[#allocation5 + $0xf8] sm:$0xff]
    %v119 = vld [vmem:[%s3] sm:$0x1]
    %v121 = vperm.slane %v119, 0
    %v123 = vmul.f32 %v87, %v121
    %v124 = vmul.f32 %v88, %v121
    %v125 = vmul.f32 %v89, %v121
    %v126 = vmul.f32 %v90, %v121
    %v127 = vmul.f32 %v91, %v121
    %v128 = vmul.f32 %v92, %v121
    %v129 = vmul.f32 %v93, %v121
    %v130 = vmul.f32 %v94, %v121
    %v131 = vmul.f32 %v95, %v121
    %v132 = vmul.f32 %v96, %v121
    %v133 = vmul.f32 %v97, %v121
    %v134 = vmul.f32 %v98, %v121
    %v135 = vmul.f32 %v99, %v121
    %v136 = vmul.f32 %v100, %v121
    %v137 = vmul.f32 %v101, %v121
    %v138 = vmul.f32 %v102, %v121
    %v139 = vmul.f32 %v103, %v121
    %v140 = vmul.f32 %v104, %v121
    %v141 = vmul.f32 %v105, %v121
    %v142 = vmul.f32 %v106, %v121
    %v143 = vmul.f32 %v107, %v121
    %v144 = vmul.f32 %v108, %v121
    %v145 = vmul.f32 %v109, %v121
    %v146 = vmul.f32 %v110, %v121
    %v147 = vmul.f32 %v111, %v121
    %v148 = vmul.f32 %v112, %v121
    %v149 = vmul.f32 %v113, %v121
    %v150 = vmul.f32 %v114, %v121
    %v151 = vmul.f32 %v115, %v121
    %v152 = vmul.f32 %v116, %v121
    %v153 = vmul.f32 %v117, %v121
    %v154 = vmul.f32 %v118, %v121
    %155 = vxpose.xlu0.b32.start [1/16] %v123, 128
    %156 = vxpose.xlu0.b32.cont [2/16] %v124, 128
    %157 = vxpose.xlu0.b32.cont [3/16] %v125, 128
    %158 = vxpose.xlu0.b32.cont [4/16] %v126, 128
    %159 = vxpose.xlu0.b32.cont [5/16] %v127, 128
    %160 = vxpose.xlu0.b32.cont [6/16] %v128, 128
    %161 = vxpose.xlu0.b32.cont [7/16] %v129, 128
    %162 = vxpose.xlu0.b32.cont [8/16] %v130, 128
    %163 = vxpose.xlu0.b32.cont [9/16] %v131, 128
    %164 = vxpose.xlu0.b32.cont [10/16] %v132, 128
    %165 = vxpose.xlu0.b32.cont [11/16] %v133, 128
    %166 = vxpose.xlu0.b32.cont [12/16] %v134, 128
    %167 = vxpose.xlu0.b32.cont [13/16] %v135, 128
    %168 = vxpose.xlu0.b32.cont [14/16] %v136, 128
    %169 = vxpose.xlu0.b32.cont [15/16] %v137, 128
    %170 = vxpose.xlu0.b32.end [16/16] %v138, 128
    %v171 = vpop.trf.xlu0
    %v172 = vpop.trf.xlu0
    %v173 = vpop.trf.xlu0
    %v174 = vpop.trf.xlu0
    %v175 = vpop.trf.xlu0
    %v176 = vpop.trf.xlu0
    %v177 = vpop.trf.xlu0
    %v178 = vpop.trf.xlu0
    %v179 = vpop.trf.xlu0
    %v180 = vpop.trf.xlu0
    %v181 = vpop.trf.xlu0
    %v182 = vpop.trf.xlu0
    %v183 = vpop.trf.xlu0
    %v184 = vpop.trf.xlu0
    %v185 = vpop.trf.xlu0
    %v186 = vpop.trf.xlu0
    %187 = vxpose.xlu0.b32.start [1/16] %v139, 128
    %188 = vxpose.xlu0.b32.cont [2/16] %v140, 128
    %189 = vxpose.xlu0.b32.cont [3/16] %v141, 128
    %190 = vxpose.xlu0.b32.cont [4/16] %v142, 128
    %191 = vxpose.xlu0.b32.cont [5/16] %v143, 128
    %192 = vxpose.xlu0.b32.cont [6/16] %v144, 128
    %193 = vxpose.xlu0.b32.cont [7/16] %v145, 128
    %194 = vxpose.xlu0.b32.cont [8/16] %v146, 128
    %195 = vxpose.xlu0.b32.cont [9/16] %v147, 128
    %196 = vxpose.xlu0.b32.cont [10/16] %v148, 128
    %197 = vxpose.xlu0.b32.cont [11/16] %v149, 128
    %198 = vxpose.xlu0.b32.cont [12/16] %v150, 128
    %199 = vxpose.xlu0.b32.cont [13/16] %v151, 128
    %200 = vxpose.xlu0.b32.cont [14/16] %v152, 128
    %201 = vxpose.xlu0.b32.cont [15/16] %v153, 128
    %202 = vxpose.xlu0.b32.end [16/16] %v154, 128
    %v203 = vpop.trf.xlu0
    %v204 = vpop.trf.xlu0
    %v205 = vpop.trf.xlu0
    %v206 = vpop.trf.xlu0
    %v207 = vpop.trf.xlu0
    %v208 = vpop.trf.xlu0
    %v209 = vpop.trf.xlu0
    %v210 = vpop.trf.xlu0
    %v211 = vpop.trf.xlu0
    %v212 = vpop.trf.xlu0
    %v213 = vpop.trf.xlu0
    %v214 = vpop.trf.xlu0
    %v215 = vpop.trf.xlu0
    %v216 = vpop.trf.xlu0
    %v217 = vpop.trf.xlu0
    %v218 = vpop.trf.xlu0
    %v219 = vadd.f32 %v171, %v172
    %v220 = vadd.f32 %v219, %v173
    %v221 = vadd.f32 %v220, %v174
    %v222 = vadd.f32 %v221, %v175
    %v223 = vadd.f32 %v222, %v176
    %v224 = vadd.f32 %v223, %v177
    %v225 = vadd.f32 %v224, %v178
    %v226 = vrot.slane %v225, 4
    %v227 = vadd.f32 %v225, %v226
    %v228 = vrot.slane %v227, 2
    %v229 = vadd.f32 %v227, %v228
    %v230 = vrot.slane %v229, 1
    %v231 = vadd.f32 %v229, %v230
    %v232 = vadd.f32 %v203, %v204
    %v233 = vadd.f32 %v232, %v205
    %v234 = vadd.f32 %v233, %v206
    %v235 = vadd.f32 %v234, %v207
    %v236 = vadd.f32 %v235, %v208
    %v237 = vadd.f32 %v236, %v209
    %v238 = vadd.f32 %v237, %v210
    %v239 = vrot.slane %v238, 4
    %v240 = vadd.f32 %v238, %v239
    %v241 = vrot.slane %v240, 2
    %v242 = vadd.f32 %v240, %v241
    %v243 = vrot.slane %v242, 1
    %v244 = vadd.f32 %v242, %v243
    %v245 = vadd.f32 %v179, %v180
    %v246 = vadd.f32 %v245, %v181
    %v247 = vadd.f32 %v246, %v182
    %v248 = vadd.f32 %v247, %v183
    %v249 = vadd.f32 %v248, %v184
    %v250 = vadd.f32 %v249, %v185
    %v251 = vadd.f32 %v250, %v186
    %v252 = vrot.slane %v251, 4
    %v253 = vadd.f32 %v251, %v252
    %v254 = vrot.slane %v253, 2
    %v255 = vadd.f32 %v253, %v254
    %v256 = vrot.slane %v255, 1
    %v257 = vadd.f32 %v255, %v256
    %v258 = vadd.f32 %v211, %v212
    %v259 = vadd.f32 %v258, %v213
    %v260 = vadd.f32 %v259, %v214
    %v261 = vadd.f32 %v260, %v215
    %v262 = vadd.f32 %v261, %v216
    %v263 = vadd.f32 %v262, %v217
    %v264 = vadd.f32 %v263, %v218
    %v265 = vrot.slane %v264, 4
    %v266 = vadd.f32 %v264, %v265
    %v267 = vrot.slane %v266, 2
    %v268 = vadd.f32 %v266, %v267
    %v269 = vrot.slane %v268, 1
    %v270 = vadd.f32 %v268, %v269
    %s271 = sld [smem:[#allocation2]]
    %v272 = vstv %s271
    %v273 = vadd.f32 %v231, %v272
    %v274 = vadd.f32 %v244, %v272
    %v275 = vadd.f32 %v257, %v272
    %v276 = vadd.f32 %v270, %v272
    %vm277 = vcmp.ge.f32.partialorder %v273, 0.0
    %vm278 = vcmp.ge.f32.partialorder %v274, 0.0
    %vm279 = vcmp.ge.f32.partialorder %v275, 0.0
    %vm280 = vcmp.ge.f32.partialorder %v276, 0.0
    %v281 = vmul.f32 %v273, 0.01
    %v282 = vmul.f32 %v274, 0.01
    %v283 = vmul.f32 %v275, 0.01
    %v284 = vmul.f32 %v276, 0.01
    %v285 = vsel %vm277, %v273, %v281
    %v286 = vsel %vm278, %v274, %v282
    %v287 = vsel %vm279, %v275, %v283
    %v288 = vsel %vm280, %v276, %v284
    %v293 = vrot.slane %v286, 6
    %v294 = vrot.slane %v288, 6
    %vm295 = vcmask 1041408
    %v296 = vsel %vm295, %v285, %v293
    %v297 = vsel %vm295, %v287, %v294
    %vm298 = vcmask 1042434
    %vm299 = vcmask 1044484
    %v300 = vsel %vm299, %v296, %v296
    %vm301 = vcmask 1046534
    %v302 = vsel %vm301, %v296, %v300
    %v303 = vrot.slane %v297, 7
    %vm304 = vcmask 1041409
    %v305 = vsel %vm304, %v303, %v302
    %vm306 = vcmask 1043459
    %v307 = vsel %vm306, %v303, %v305
    %vm308 = vcmask 1045509
    %v309 = vsel %vm308, %v303, %v307
    %vm310 = vcmask 1047559
    %v311 = vsel %vm310, %v303, %v309
    %313 = vst [vmem:[#allocation11] sm:$0xf] %v311
    %v314 = vld [vmem:[#allocation8] sm:$0xff]
    %v315 = vld [vmem:[#allocation8 + $0x8] sm:$0xff]
    %v316 = vld [vmem:[#allocation8 + $0x10] sm:$0xff]
    %v317 = vld [vmem:[#allocation8 + $0x18] sm:$0xff]
    %v318 = vld [vmem:[#allocation8 + $0x20] sm:$0xff]
    %v319 = vld [vmem:[#allocation8 + $0x28] sm:$0xff]
    %v320 = vld [vmem:[#allocation8 + $0x30] sm:$0xff]
    %v321 = vld [vmem:[#allocation8 + $0x38] sm:$0xff]
    %v322 = vld [vmem:[#allocation8 + $0x40] sm:$0xff]
    %v323 = vld [vmem:[#allocation8 + $0x48] sm:$0xff]
    %v324 = vld [vmem:[#allocation8 + $0x50] sm:$0xff]
    %v325 = vld [vmem:[#allocation8 + $0x58] sm:$0xff]
    %v326 = vld [vmem:[#allocation8 + $0x60] sm:$0xff]
    %v327 = vld [vmem:[#allocation8 + $0x68] sm:$0xff]
    %v328 = vld [vmem:[#allocation8 + $0x70] sm:$0xff]
    %v329 = vld [vmem:[#allocation8 + $0x78] sm:$0xff]
    %v330 = vld [vmem:[#allocation8 + $0x80] sm:$0xff]
    %v331 = vld [vmem:[#allocation8 + $0x88] sm:$0xff]
    %v332 = vld [vmem:[#allocation8 + $0x90] sm:$0xff]
    %v333 = vld [vmem:[#allocation8 + $0x98] sm:$0xff]
    %v334 = vld [vmem:[#allocation8 + $0xa0] sm:$0xff]
    %v335 = vld [vmem:[#allocation8 + $0xa8] sm:$0xff]
    %v336 = vld [vmem:[#allocation8 + $0xb0] sm:$0xff]
    %v337 = vld [vmem:[#allocation8 + $0xb8] sm:$0xff]
    %v338 = vld [vmem:[#allocation8 + $0xc0] sm:$0xff]
    %v339 = vld [vmem:[#allocation8 + $0xc8] sm:$0xff]
    %v340 = vld [vmem:[#allocation8 + $0xd0] sm:$0xff]
    %v341 = vld [vmem:[#allocation8 + $0xd8] sm:$0xff]
    %v342 = vld [vmem:[#allocation8 + $0xe0] sm:$0xff]
    %v343 = vld [vmem:[#allocation8 + $0xe8] sm:$0xff]
    %v344 = vld [vmem:[#allocation8 + $0xf0] sm:$0xff]
    %v345 = vld [vmem:[#allocation8 + $0xf8] sm:$0xff]
    %v346 = vld [vmem:[%s4] sm:$0x1]
    %v348 = vperm.slane %v346, 0
    %v350 = vmul.f32 %v314, %v348
    %v351 = vmul.f32 %v315, %v348
    %v352 = vmul.f32 %v316, %v348
    %v353 = vmul.f32 %v317, %v348
    %v354 = vmul.f32 %v318, %v348
    %v355 = vmul.f32 %v319, %v348
    %v356 = vmul.f32 %v320, %v348
    %v357 = vmul.f32 %v321, %v348
    %v358 = vmul.f32 %v322, %v348
    %v359 = vmul.f32 %v323, %v348
    %v360 = vmul.f32 %v324, %v348
    %v361 = vmul.f32 %v325, %v348
    %v362 = vmul.f32 %v326, %v348
    %v363 = vmul.f32 %v327, %v348
    %v364 = vmul.f32 %v328, %v348
    %v365 = vmul.f32 %v329, %v348
    %v366 = vmul.f32 %v330, %v348
    %v367 = vmul.f32 %v331, %v348
    %v368 = vmul.f32 %v332, %v348
    %v369 = vmul.f32 %v333, %v348
    %v370 = vmul.f32 %v334, %v348
    %v371 = vmul.f32 %v335, %v348
    %v372 = vmul.f32 %v336, %v348
    %v373 = vmul.f32 %v337, %v348
    %v374 = vmul.f32 %v338, %v348
    %v375 = vmul.f32 %v339, %v348
    %v376 = vmul.f32 %v340, %v348
    %v377 = vmul.f32 %v341, %v348
    %v378 = vmul.f32 %v342, %v348
    %v379 = vmul.f32 %v343, %v348
    %v380 = vmul.f32 %v344, %v348
    %v381 = vmul.f32 %v345, %v348
    %382 = vxpose.xlu0.b32.start [1/16] %v350, 128
    %383 = vxpose.xlu0.b32.cont [2/16] %v351, 128
    %384 = vxpose.xlu0.b32.cont [3/16] %v352, 128
    %385 = vxpose.xlu0.b32.cont [4/16] %v353, 128
    %386 = vxpose.xlu0.b32.cont [5/16] %v354, 128
    %387 = vxpose.xlu0.b32.cont [6/16] %v355, 128
    %388 = vxpose.xlu0.b32.cont [7/16] %v356, 128
    %389 = vxpose.xlu0.b32.cont [8/16] %v357, 128
    %390 = vxpose.xlu0.b32.cont [9/16] %v358, 128
    %391 = vxpose.xlu0.b32.cont [10/16] %v359, 128
    %392 = vxpose.xlu0.b32.cont [11/16] %v360, 128
    %393 = vxpose.xlu0.b32.cont [12/16] %v361, 128
    %394 = vxpose.xlu0.b32.cont [13/16] %v362, 128
    %395 = vxpose.xlu0.b32.cont [14/16] %v363, 128
    %396 = vxpose.xlu0.b32.cont [15/16] %v364, 128
    %397 = vxpose.xlu0.b32.end [16/16] %v365, 128
    %v398 = vpop.trf.xlu0
    %v399 = vpop.trf.xlu0
    %v400 = vpop.trf.xlu0
    %v401 = vpop.trf.xlu0
    %v402 = vpop.trf.xlu0
    %v403 = vpop.trf.xlu0
    %v404 = vpop.trf.xlu0
    %v405 = vpop.trf.xlu0
    %v406 = vpop.trf.xlu0
    %v407 = vpop.trf.xlu0
    %v408 = vpop.trf.xlu0
    %v409 = vpop.trf.xlu0
    %v410 = vpop.trf.xlu0
    %v411 = vpop.trf.xlu0
    %v412 = vpop.trf.xlu0
    %v413 = vpop.trf.xlu0
    %414 = vxpose.xlu0.b32.start [1/16] %v366, 128
    %415 = vxpose.xlu0.b32.cont [2/16] %v367, 128
    %416 = vxpose.xlu0.b32.cont [3/16] %v368, 128
    %417 = vxpose.xlu0.b32.cont [4/16] %v369, 128
    %418 = vxpose.xlu0.b32.cont [5/16] %v370, 128
    %419 = vxpose.xlu0.b32.cont [6/16] %v371, 128
    %420 = vxpose.xlu0.b32.cont [7/16] %v372, 128
    %421 = vxpose.xlu0.b32.cont [8/16] %v373, 128
    %422 = vxpose.xlu0.b32.cont [9/16] %v374, 128
    %423 = vxpose.xlu0.b32.cont [10/16] %v375, 128
    %424 = vxpose.xlu0.b32.cont [11/16] %v376, 128
    %425 = vxpose.xlu0.b32.cont [12/16] %v377, 128
    %426 = vxpose.xlu0.b32.cont [13/16] %v378, 128
    %427 = vxpose.xlu0.b32.cont [14/16] %v379, 128
    %428 = vxpose.xlu0.b32.cont [15/16] %v380, 128
    %429 = vxpose.xlu0.b32.end [16/16] %v381, 128
    %v430 = vpop.trf.xlu0
    %v431 = vpop.trf.xlu0
    %v432 = vpop.trf.xlu0
    %v433 = vpop.trf.xlu0
    %v434 = vpop.trf.xlu0
    %v435 = vpop.trf.xlu0
    %v436 = vpop.trf.xlu0
    %v437 = vpop.trf.xlu0
    %v438 = vpop.trf.xlu0
    %v439 = vpop.trf.xlu0
    %v440 = vpop.trf.xlu0
    %v441 = vpop.trf.xlu0
    %v442 = vpop.trf.xlu0
    %v443 = vpop.trf.xlu0
    %v444 = vpop.trf.xlu0
    %v445 = vpop.trf.xlu0
    %v446 = vadd.f32 %v398, %v399
    %v447 = vadd.f32 %v446, %v400
    %v448 = vadd.f32 %v447, %v401
    %v449 = vadd.f32 %v448, %v402
    %v450 = vadd.f32 %v449, %v403
    %v451 = vadd.f32 %v450, %v404
    %v452 = vadd.f32 %v451, %v405
    %v453 = vrot.slane %v452, 4
    %v454 = vadd.f32 %v452, %v453
    %v455 = vrot.slane %v454, 2
    %v456 = vadd.f32 %v454, %v455
    %v457 = vrot.slane %v456, 1
    %v458 = vadd.f32 %v456, %v457
    %v459 = vadd.f32 %v430, %v431
    %v460 = vadd.f32 %v459, %v432
    %v461 = vadd.f32 %v460, %v433
    %v462 = vadd.f32 %v461, %v434
    %v463 = vadd.f32 %v462, %v435
    %v464 = vadd.f32 %v463, %v436
    %v465 = vadd.f32 %v464, %v437
    %v466 = vrot.slane %v465, 4
    %v467 = vadd.f32 %v465, %v466
    %v468 = vrot.slane %v467, 2
    %v469 = vadd.f32 %v467, %v468
    %v470 = vrot.slane %v469, 1
    %v471 = vadd.f32 %v469, %v470
    %v472 = vadd.f32 %v406, %v407
    %v473 = vadd.f32 %v472, %v408
    %v474 = vadd.f32 %v473, %v409
    %v475 = vadd.f32 %v474, %v410
    %v476 = vadd.f32 %v475, %v411
    %v477 = vadd.f32 %v476, %v412
    %v478 = vadd.f32 %v477, %v413
    %v479 = vrot.slane %v478, 4
    %v480 = vadd.f32 %v478, %v479
    %v481 = vrot.slane %v480, 2
    %v482 = vadd.f32 %v480, %v481
    %v483 = vrot.slane %v482, 1
    %v484 = vadd.f32 %v482, %v483
    %v485 = vadd.f32 %v438, %v439
    %v486 = vadd.f32 %v485, %v440
    %v487 = vadd.f32 %v486, %v441
    %v488 = vadd.f32 %v487, %v442
    %v489 = vadd.f32 %v488, %v443
    %v490 = vadd.f32 %v489, %v444
    %v491 = vadd.f32 %v490, %v445
    %v492 = vrot.slane %v491, 4
    %v493 = vadd.f32 %v491, %v492
    %v494 = vrot.slane %v493, 2
    %v495 = vadd.f32 %v493, %v494
    %v496 = vrot.slane %v495, 1
    %v497 = vadd.f32 %v495, %v496
    %s498 = sld [smem:[#allocation3]]
    %v499 = vstv %s498
    %v500 = vadd.f32 %v458, %v499
    %v501 = vadd.f32 %v471, %v499
    %v502 = vadd.f32 %v484, %v499
    %v503 = vadd.f32 %v497, %v499
    %vm504 = vcmp.ge.f32.partialorder %v500, 0.0
    %vm505 = vcmp.ge.f32.partialorder %v501, 0.0
    %vm506 = vcmp.ge.f32.partialorder %v502, 0.0
    %vm507 = vcmp.ge.f32.partialorder %v503, 0.0
    %v508 = vmul.f32 %v500, 0.01
    %v509 = vmul.f32 %v501, 0.01
    %v510 = vmul.f32 %v502, 0.01
    %v511 = vmul.f32 %v503, 0.01
    %v512 = vsel %vm504, %v500, %v508
    %v513 = vsel %vm505, %v501, %v509
    %v514 = vsel %vm506, %v502, %v510
    %v515 = vsel %vm507, %v503, %v511
    %v520 = vrot.slane %v513, 6
    %v521 = vrot.slane %v515, 6
    %v522 = vsel %vm295, %v512, %v520
    %v523 = vsel %vm295, %v514, %v521
    %v524 = vsel %vm299, %v522, %v522
    %v525 = vsel %vm301, %v522, %v524
    %v526 = vrot.slane %v523, 7
    %v527 = vsel %vm304, %v526, %v525
    %v528 = vsel %vm306, %v526, %v527
    %v529 = vsel %vm308, %v526, %v528
    %v530 = vsel %vm310, %v526, %v529
    %532 = vst [vmem:[#allocation12] sm:$0xf] %v530
    %v533 = vld [vmem:[#allocation10] sm:$0xff]
    %v534 = vld [vmem:[#allocation10 + $0x8] sm:$0xff]
    %v535 = vld [vmem:[#allocation10 + $0x10] sm:$0xff]
    %v536 = vld [vmem:[#allocation10 + $0x18] sm:$0xff]
    %v537 = vld [vmem:[#allocation10 + $0x20] sm:$0xff]
    %v538 = vld [vmem:[#allocation10 + $0x28] sm:$0xff]
    %v539 = vld [vmem:[#allocation10 + $0x30] sm:$0xff]
    %v540 = vld [vmem:[#allocation10 + $0x38] sm:$0xff]
    %v541 = vld [vmem:[#allocation10 + $0x40] sm:$0xff]
    %v542 = vld [vmem:[#allocation10 + $0x48] sm:$0xff]
    %v543 = vld [vmem:[#allocation10 + $0x50] sm:$0xff]
    %v544 = vld [vmem:[#allocation10 + $0x58] sm:$0xff]
    %v545 = vld [vmem:[#allocation10 + $0x60] sm:$0xff]
    %v546 = vld [vmem:[#allocation10 + $0x68] sm:$0xff]
    %v547 = vld [vmem:[#allocation10 + $0x70] sm:$0xff]
    %v548 = vld [vmem:[#allocation10 + $0x78] sm:$0xff]
    %v549 = vld [vmem:[%s5] sm:$0x1]
    %v551 = vperm.slane %v549, 0
    %v553 = vmul.f32 %v533, %v551
    %v554 = vmul.f32 %v534, %v551
    %v555 = vmul.f32 %v535, %v551
    %v556 = vmul.f32 %v536, %v551
    %v557 = vmul.f32 %v537, %v551
    %v558 = vmul.f32 %v538, %v551
    %v559 = vmul.f32 %v539, %v551
    %v560 = vmul.f32 %v540, %v551
    %v561 = vmul.f32 %v541, %v551
    %v562 = vmul.f32 %v542, %v551
    %v563 = vmul.f32 %v543, %v551
    %v564 = vmul.f32 %v544, %v551
    %v565 = vmul.f32 %v545, %v551
    %v566 = vmul.f32 %v546, %v551
    %v567 = vmul.f32 %v547, %v551
    %v568 = vmul.f32 %v548, %v551
    %569 = vxpose.xlu0.b32.start [1/16] %v553, 128
    %570 = vxpose.xlu0.b32.cont [2/16] %v554, 128
    %571 = vxpose.xlu0.b32.cont [3/16] %v555, 128
    %572 = vxpose.xlu0.b32.cont [4/16] %v556, 128
    %573 = vxpose.xlu0.b32.cont [5/16] %v557, 128
    %574 = vxpose.xlu0.b32.cont [6/16] %v558, 128
    %575 = vxpose.xlu0.b32.cont [7/16] %v559, 128
    %576 = vxpose.xlu0.b32.cont [8/16] %v560, 128
    %577 = vxpose.xlu0.b32.cont [9/16] %v561, 128
    %578 = vxpose.xlu0.b32.cont [10/16] %v562, 128
    %579 = vxpose.xlu0.b32.cont [11/16] %v563, 128
    %580 = vxpose.xlu0.b32.cont [12/16] %v564, 128
    %581 = vxpose.xlu0.b32.cont [13/16] %v565, 128
    %582 = vxpose.xlu0.b32.cont [14/16] %v566, 128
    %583 = vxpose.xlu0.b32.cont [15/16] %v567, 128
    %584 = vxpose.xlu0.b32.end [16/16] %v568, 128
    %v585 = vpop.trf.xlu0
    %v586 = vpop.trf.xlu0
    %v587 = vpop.trf.xlu0
    %v588 = vpop.trf.xlu0
    %v589 = vpop.trf.xlu0
    %v590 = vpop.trf.xlu0
    %v591 = vpop.trf.xlu0
    %v592 = vpop.trf.xlu0
    %v593 = vpop.trf.xlu0
    %v594 = vpop.trf.xlu0
    %v595 = vpop.trf.xlu0
    %v596 = vpop.trf.xlu0
    %v597 = vpop.trf.xlu0
    %v598 = vpop.trf.xlu0
    %v599 = vpop.trf.xlu0
    %v600 = vpop.trf.xlu0
    %v601 = vadd.f32 %v585, %v586
    %v602 = vadd.f32 %v601, %v587
    %v603 = vadd.f32 %v602, %v588
    %v604 = vrot.slane %v603, 4
    %v605 = vadd.f32 %v603, %v604
    %v606 = vrot.slane %v605, 2
    %v607 = vadd.f32 %v605, %v606
    %v608 = vrot.slane %v607, 1
    %v609 = vadd.f32 %v607, %v608
    %v610 = vadd.f32 %v589, %v590
    %v611 = vadd.f32 %v610, %v591
    %v612 = vadd.f32 %v611, %v592
    %v613 = vrot.slane %v612, 4
    %v614 = vadd.f32 %v612, %v613
    %v615 = vrot.slane %v614, 2
    %v616 = vadd.f32 %v614, %v615
    %v617 = vrot.slane %v616, 1
    %v618 = vadd.f32 %v616, %v617
    %v619 = vadd.f32 %v593, %v594
    %v620 = vadd.f32 %v619, %v595
    %v621 = vadd.f32 %v620, %v596
    %v622 = vrot.slane %v621, 4
    %v623 = vadd.f32 %v621, %v622
    %v624 = vrot.slane %v623, 2
    %v625 = vadd.f32 %v623, %v624
    %v626 = vrot.slane %v625, 1
    %v627 = vadd.f32 %v625, %v626
    %v628 = vadd.f32 %v597, %v598
    %v629 = vadd.f32 %v628, %v599
    %v630 = vadd.f32 %v629, %v600
    %v631 = vrot.slane %v630, 4
    %v632 = vadd.f32 %v630, %v631
    %v633 = vrot.slane %v632, 2
    %v634 = vadd.f32 %v632, %v633
    %v635 = vrot.slane %v634, 1
    %v636 = vadd.f32 %v634, %v635
    %s637 = sld [smem:[#allocation4]]
    %v638 = vstv %s637
    %v639 = vadd.f32 %v609, %v638
    %v640 = vadd.f32 %v618, %v638
    %v641 = vadd.f32 %v627, %v638
    %v642 = vadd.f32 %v636, %v638
    %vm643 = vcmp.ge.f32.partialorder %v639, 0.0
    %vm644 = vcmp.ge.f32.partialorder %v640, 0.0
    %vm645 = vcmp.ge.f32.partialorder %v641, 0.0
    %vm646 = vcmp.ge.f32.partialorder %v642, 0.0
    %v647 = vmul.f32 %v639, 0.01
    %v648 = vmul.f32 %v640, 0.01
    %v649 = vmul.f32 %v641, 0.01
    %v650 = vmul.f32 %v642, 0.01
    %v651 = vsel %vm643, %v639, %v647
    %v652 = vsel %vm644, %v640, %v648
    %v653 = vsel %vm645, %v641, %v649
    %v654 = vsel %vm646, %v642, %v650
    %v659 = vsel %vm304, %v652, %v651
    %v660 = vsel %vm298, %v653, %v659
    %v661 = vsel %vm306, %v654, %v660
    %663 = vst [vmem:[#allocation14] sm:$0xf] %v661
    // Predicated region
    $region50: #{tpu_custom_call.1} parent=1 // pred_check
      _
    $region51: #{tpu_custom_call.1} parent=1 // pred_check_branch
      %665 = sbr.rel (0) target = $region53
    $region52: #{tpu_custom_call.1} parent=1 // pred_region
      %667 = vsyncadd [#allocation7], 0
      %s669 = sshll.u32 [#allocation11], 4
      %s670 = int_to_ptr.vmem [resolvable:$true] %s669
      %s671 = sshll.u32 %s9, 4
      %s672 = int_to_ptr.hbm [resolvable:$true] %s671
      %674 = dma.vmem_to_hbm [thread:$0]  %s670, 64, %s672, [#allocation7]
    $region53: #{tpu_custom_call.1} parent=1 // pred_fallthru
      _
    // Predicated region
    $region54: #{tpu_custom_call.1} parent=1 // pred_check
      _
    $region55: #{tpu_custom_call.1} parent=1 // pred_check_branch
      %676 = sbr.rel (0) target = $region57
    $region56: #{tpu_custom_call.1} parent=1 // pred_region
      %678 = vsyncadd [#allocation13], 0
      %s680 = sshll.u32 [#allocation12], 4
      %s681 = int_to_ptr.vmem [resolvable:$true] %s680
      %s682 = sshll.u32 %s10, 4
      %s683 = int_to_ptr.hbm [resolvable:$true] %s682
      %685 = dma.vmem_to_hbm [thread:$0]  %s681, 64, %s683, [#allocation13]
    $region57: #{tpu_custom_call.1} parent=1 // pred_fallthru
      _
    // Predicated region
    $region58: #{tpu_custom_call.1} parent=1 // pred_check
      _
    $region59: #{tpu_custom_call.1} parent=1 // pred_check_branch
      %687 = sbr.rel (0) target = $region61
    $region60: #{tpu_custom_call.1} parent=1 // pred_region
      %689 = vsyncadd [#allocation13], 0
      %s691 = sshll.u32 [#allocation14], 4
      %s692 = int_to_ptr.vmem [resolvable:$true] %s691
      %s693 = sshll.u32 %s11, 4
      %s694 = int_to_ptr.hbm [resolvable:$true] %s693
      %696 = dma.vmem_to_hbm [thread:$0]  %s692, 64, %s694, [#allocation13]
    $region61: #{tpu_custom_call.1} parent=1 // pred_fallthru
      _
    // Predicated region
    $region62: #{tpu_custom_call.1} parent=1 // pred_check
      _
    $region63: #{tpu_custom_call.1} parent=1 // pred_check_branch
      %698 = sbr.rel (0) target = $region65
    $region64: #{tpu_custom_call.1} parent=1 // pred_region
      %700 = dma.done [#allocation7], 64
    $region65: #{tpu_custom_call.1} parent=1 // pred_fallthru
      _
    // Predicated region
    $region66: #{tpu_custom_call.1} parent=1 // pred_check
      _
    $region67: #{tpu_custom_call.1} parent=1 // pred_check_branch
      %702 = sbr.rel (0) target = $region69
    $region68: #{tpu_custom_call.1} parent=1 // pred_region
      %704 = dma.done [#allocation13], 64
    $region69: #{tpu_custom_call.1} parent=1 // pred_fallthru
      _
    // Predicated region
    $region70: #{tpu_custom_call.1} parent=1 // pred_check
      _
    $region71: #{tpu_custom_call.1} parent=1 // pred_check_branch
      %706 = sbr.rel (0) target = $region73
    $region72: #{tpu_custom_call.1} parent=1 // pred_region
      %708 = dma.done [#allocation13], 64
    $region73: #{tpu_custom_call.1} parent=1 // pred_fallthru
      _
    %709 = vsyncpa [#allocation6], 1
    %710 = vsyncpa [#allocation9], 1
    %711 = vsyncpa [#allocation7], 1
    %712 = vsyncpa [#allocation13], 1

</llo_original>
